<compile_context>
chip_gen: v6e
topology: v6e:2x2x1
jax: 0.10.0
libtpu: 0.0.40
codegen_flags: <defaults>
</compile_context>

<pallas_src>
import jax
import jax.numpy as jnp
from jax import lax
from jax.experimental import pallas as pl
from jax.experimental.pallas import tpu as pltpu

IMAGE_SIZE = 16          # scaled-down stand-in for the module's 220
STEM_CHANNELS = 32       # stand-in for the InceptionResnetV1 stem width
EMB_DIM = 128            # stand-in for the 512-d face embedding
KSIZE = 3
STRIDE = 2

KP = KSIZE * KSIZE * 3   # 27 raw im2col patch width
KP_PAD = 32              # zero-padded contraction width (unmasked loads)


def _round_up(x, m):
    return (x + m - 1) // m * m


# ----------------------------- fused Pallas kernel -------------------------- #

def _fused_id_encoder_kernel(p_ref, wc_ref, sc_ref, bc_ref,
                             pool_ref, wl_ref, sb_ref, bb_ref, o_ref):
    # stem conv3x3/s2 as an im2col matmul: bf16 inputs, f32 MXU accumulate.
    acc = jnp.dot(p_ref[...], wc_ref[...],
                  preferred_element_type=jnp.float32)                 # (Mp, C) f32
    # folded-BN affine + ReLU (f32, VPU). Padded rows are killed by pool_mat below.
    feat = jnp.maximum(acc * sc_ref[...] + bc_ref[...], 0.0)
    # global average pool as an MXU matmul with a (B, Mp) 1/HW pooling matrix
    # (zero weight on padded rows) -> avoids the cross-sublane XLU reduction.
    pooled = jnp.dot(pool_ref[...], feat,
                     preferred_element_type=jnp.float32)              # (B, C) f32
    # last_linear + folded last_bn (bf16 matmul, f32 accumulate + affine).
    y = jnp.dot(pooled.astype(jnp.bfloat16), wl_ref[...],
                preferred_element_type=jnp.float32)                   # (B, E) f32
    y = y * sb_ref[...] + bb_ref[...]
    # L2 normalize (classify=False embedding) via rsqrt on the EUP path.
    sumsq = jnp.sum(y * y, axis=-1, keepdims=True)
    o_ref[...] = y * lax.rsqrt(jnp.maximum(sumsq, 1e-24))


def fused_id_encoder(patches, w_conv, s_conv, b_conv, pool_mat, w_lin, s_bn, b_bn):
    Mp, Kp = patches.shape
    C = w_conv.shape[1]
    B = pool_mat.shape[0]
    E = w_lin.shape[1]
    return pl.pallas_call(
        _fused_id_encoder_kernel,
        out_shape=jax.ShapeDtypeStruct((B, E), jnp.float32),
        grid=(1,),
        in_specs=[
            pl.BlockSpec((Mp, Kp), lambda i: (0, 0)),   # padded im2col patches (bf16)
            pl.BlockSpec((Kp, C), lambda i: (0, 0)),    # folded conv weight (bf16)
            pl.BlockSpec((1, C), lambda i: (0, 0)),     # BN scale (f32)
            pl.BlockSpec((1, C), lambda i: (0, 0)),     # BN bias (f32)
            pl.BlockSpec((B, Mp), lambda i: (0, 0)),    # pooling matrix (f32)
            pl.BlockSpec((C, E), lambda i: (0, 0)),     # last_linear weight (bf16)
            pl.BlockSpec((1, E), lambda i: (0, 0)),     # last_bn scale (f32)
            pl.BlockSpec((1, E), lambda i: (0, 0)),     # last_bn bias (f32)
        ],
        out_specs=pl.BlockSpec((B, E), lambda i: (0, 0)),   # lane-dense E=128 output
        compiler_params=pltpu.CompilerParams(
            dimension_semantics=("arbitrary",)),
    )(patches, w_conv, s_conv, b_conv, pool_mat, w_lin, s_bn, b_bn)


# ------------------------------- JAX glue ----------------------------------- #

def crop_transform(img_chw):
    """transforms.Resize(IMAGE_SIZE) + transforms.CenterCrop(IMAGE_SIZE) on a CHW image."""
    # TODO(synk): PIL bilinear (antialiased) resize is approximated with jax.image.resize.
    C, H, W = img_chw.shape
    scale = IMAGE_SIZE / min(H, W)
    nh, nw = int(round(H * scale)), int(round(W * scale))
    r = jax.image.resize(img_chw, (C, nh, nw), method="bilinear")
    top = (nh - IMAGE_SIZE) // 2
    left = (nw - IMAGE_SIZE) // 2
    return r[:, top:top + IMAGE_SIZE, left:left + IMAGE_SIZE]


def im2col(x_nhwc, k, stride):
    """kxk / stride patches -> (B*OH*OW, k*k*C) rows with (kh, kw, Cin)-ordered columns."""
    B, H, W, C = x_nhwc.shape
    OH = (H - k) // stride + 1
    OW = (W - k) // stride + 1
    cols = []
    for di in range(k):
        for dj in range(k):
            cols.append(
                x_nhwc[:, di:di + stride * (OH - 1) + 1:stride,
                          dj:dj + stride * (OW - 1) + 1:stride, :]
            )
    p = jnp.stack(cols, axis=3)                        # (B, OH, OW, k*k, C)
    return p.reshape(B * OH * OW, k * k * C), B, OH, OW


def init_params(key):
    k1, k2, k3, k4, k5, k6 = jax.random.split(key, 6)
    # conv weight in PyTorch (Cout, Cin, KH, KW) layout, folded to (kh*kw*Cin, Cout),
    # zero-padded on the contraction axis and cast to bf16 for the MXU.
    w_conv_oihw = jax.random.normal(k1, (STEM_CHANNELS, 3, KSIZE, KSIZE), jnp.float32) * 0.1
    w_conv = jnp.transpose(w_conv_oihw, (2, 3, 1, 0)).reshape(KP, STEM_CHANNELS)
    w_conv = jnp.pad(w_conv, ((0, KP_PAD - KP), (0, 0))).astype(jnp.bfloat16)
    s_conv = 1.0 + 0.05 * jax.random.normal(k2, (1, STEM_CHANNELS), jnp.float32)
    b_conv = 0.05 * jax.random.normal(k3, (1, STEM_CHANNELS), jnp.float32)
    w_lin = (jax.random.normal(k4, (STEM_CHANNELS, EMB_DIM), jnp.float32) * 0.1
             ).astype(jnp.bfloat16)
    s_bn = 1.0 + 0.05 * jax.random.normal(k5, (1, EMB_DIM), jnp.float32)
    b_bn = 0.05 * jax.random.normal(k6, (1, EMB_DIM), jnp.float32)
    return dict(w_conv=w_conv, s_conv=s_conv, b_conv=b_conv,
                w_lin=w_lin, s_bn=s_bn, b_bn=b_bn)


def _preprocess(images_nchw):
    """Crop/resize + im2col + padding + pooling matrix (shared by kernel path and reference)."""
    # MTCNN returns no boxes here -> the module's `except` path: whole-image crop.
    cropped = jax.vmap(crop_transform)(images_nchw)            # (B, 3, S, S)
    x = jnp.transpose(cropped, (0, 2, 3, 1))                   # NHWC
    patches, B, OH, OW = im2col(x, KSIZE, STRIDE)
    M = B * OH * OW
    M_pad = _round_up(M, 8)
    patches = jnp.pad(
        patches, ((0, M_pad - M), (0, KP_PAD - patches.shape[1]))
    ).astype(jnp.bfloat16)                                     # (M_pad, KP_PAD) bf16

    # per-batch 1/HW pooling matrix; zero weight on rows outside each batch / padding.
    hw = OH * OW
    rows = jnp.arange(M_pad)
    pool_mat = ((rows[None, :] // hw) == jnp.arange(B)[:, None]) & (rows[None, :] < M)
    pool_mat = pool_mat.astype(jnp.float32) / float(hw)        # (B, M_pad) f32
    return patches, pool_mat


@jax.jit
def id_encoder_forward(images_nchw, params):
    patches, pool_mat = _preprocess(images_nchw)
    emb = fused_id_encoder(patches, params["w_conv"], params["s_conv"], params["b_conv"],
                           pool_mat, params["w_lin"], params["s_bn"], params["b_bn"])
    return emb                                                 # (B, EMB_DIM), L2-normalized


@jax.jit
def id_encoder_reference(images_nchw, params):
    """Pure-JAX reference of the fused head (same bf16/f32 mix as the kernel)."""
    patches, pool_mat = _preprocess(images_nchw)
    acc = jnp.dot(patches, params["w_conv"], preferred_element_type=jnp.float32)
    feat = jnp.maximum(acc * params["s_conv"] + params["b_conv"], 0.0)
    pooled = jnp.dot(pool_mat, feat, preferred_element_type=jnp.float32)
    y = jnp.dot(pooled.astype(jnp.bfloat16), params["w_lin"],
                preferred_element_type=jnp.float32)
    y = y * params["s_bn"] + params["b_bn"]
    sumsq = jnp.sum(y * y, axis=-1, keepdims=True)
    return y * lax.rsqrt(jnp.maximum(sumsq, 1e-24))


if __name__ == "__main__":
    key = jax.random.PRNGKey(0)
    k_img, k_par = jax.random.split(key)
    images = jax.random.uniform(k_img, (2, 3, 24, 20), dtype=jnp.float32)  # NCHW, like PyTorch
    params = init_params(k_par)

    emb = id_encoder_forward(images, params)
    emb = jax.block_until_ready(emb)

    assert emb.shape == (2, EMB_DIM) and emb.dtype == jnp.float32
    # embeddings are L2-normalized like InceptionResnetV1(classify=False)
    norms = jnp.linalg.norm(emb, axis=1)
    assert bool(jnp.all(jnp.abs(norms - 1.0) < 1e-4))
    # kernel vs pure-JAX reference
    ref = jax.block_until_ready(id_encoder_reference(images, params))
    assert bool(jnp.max(jnp.abs(emb - ref)) < 3e-2)
    print("KERNEL_OK")
</pallas_src>

<mosaic_0001>
module attributes {stable_mosaic.version = 11 : i64} {
  func.func @_fused_id_encoder_kernel(%arg0: i32, %arg1: memref<104x32xbf16, #tpu.memory_space<vmem>>, %arg2: memref<32x32xbf16, #tpu.memory_space<vmem>>, %arg3: memref<1x32xf32, #tpu.memory_space<vmem>>, %arg4: memref<1x32xf32, #tpu.memory_space<vmem>>, %arg5: memref<2x104xf32, #tpu.memory_space<vmem>>, %arg6: memref<32x128xbf16, #tpu.memory_space<vmem>>, %arg7: memref<1x128xf32, #tpu.memory_space<vmem>>, %arg8: memref<1x128xf32, #tpu.memory_space<vmem>>, %arg9: memref<2x128xf32, #tpu.memory_space<vmem>>) attributes {dimension_semantics = [#tpu.dimension_semantics<arbitrary>], iteration_bounds = array<i64: 1>, scalar_prefetch = 0 : i64, scratch_operands = 0 : i64, tpu.core_type = #tpu.core_type<tc>, window_params = [{pipeline_mode = #tpu.pipeline_mode<synchronous>, transform_indices = @transform_0, window_bounds = array<i64: 104, 32>}, {pipeline_mode = #tpu.pipeline_mode<synchronous>, transform_indices = @transform_1, window_bounds = array<i64: 32, 32>}, {pipeline_mode = #tpu.pipeline_mode<synchronous>, transform_indices = @transform_2, window_bounds = array<i64: 1, 32>}, {pipeline_mode = #tpu.pipeline_mode<synchronous>, transform_indices = @transform_3, window_bounds = array<i64: 1, 32>}, {pipeline_mode = #tpu.pipeline_mode<synchronous>, transform_indices = @transform_4, window_bounds = array<i64: 2, 104>}, {pipeline_mode = #tpu.pipeline_mode<synchronous>, transform_indices = @transform_5, window_bounds = array<i64: 32, 128>}, {pipeline_mode = #tpu.pipeline_mode<synchronous>, transform_indices = @transform_6, window_bounds = array<i64: 1, 128>}, {pipeline_mode = #tpu.pipeline_mode<synchronous>, transform_indices = @transform_7, window_bounds = array<i64: 1, 128>}, {pipeline_mode = #tpu.pipeline_mode<synchronous>, transform_indices = @transform_8, window_bounds = array<i64: 2, 128>}]} {
    %c0 = arith.constant 0 : index
    %c0_0 = arith.constant 0 : index
    %0 = vector.load %arg1[%c0, %c0_0] : memref<104x32xbf16, #tpu.memory_space<vmem>>, vector<104x32xbf16>
    %c0_1 = arith.constant 0 : index
    %c0_2 = arith.constant 0 : index
    %1 = vector.load %arg2[%c0_1, %c0_2] : memref<32x32xbf16, #tpu.memory_space<vmem>>, vector<32x32xbf16>
    %cst = arith.constant dense<0.000000e+00> : vector<104x32xf32>
    %2 = tpu.matmul %0, %1, %cst {dimension_numbers = #tpu.dot_dimension_numbers<[1], [0], [0], [1], [0, 0, 1, 1], [], []>} : vector<104x32xbf16>, vector<32x32xbf16>, vector<104x32xf32> -> vector<104x32xf32>
    %c0_3 = arith.constant 0 : index
    %c0_4 = arith.constant 0 : index
    %3 = vector.load %arg3[%c0_3, %c0_4] : memref<1x32xf32, #tpu.memory_space<vmem>>, vector<1x32xf32>
    %4 = vector.broadcast %3 : vector<1x32xf32> to vector<104x32xf32>
    %5 = arith.mulf %2, %4 : vector<104x32xf32>
    %c0_5 = arith.constant 0 : index
    %c0_6 = arith.constant 0 : index
    %6 = vector.load %arg4[%c0_5, %c0_6] : memref<1x32xf32, #tpu.memory_space<vmem>>, vector<1x32xf32>
    %7 = vector.broadcast %6 : vector<1x32xf32> to vector<104x32xf32>
    %8 = arith.addf %5, %7 : vector<104x32xf32>
    %cst_7 = arith.constant 0.000000e+00 : f32
    %9 = vector.broadcast %cst_7 : f32 to vector<104x32xf32>
    %10 = arith.maximumf %8, %9 : vector<104x32xf32>
    %c0_8 = arith.constant 0 : index
    %c0_9 = arith.constant 0 : index
    %11 = vector.load %arg5[%c0_8, %c0_9] : memref<2x104xf32, #tpu.memory_space<vmem>>, vector<2x104xf32>
    %cst_10 = arith.constant dense<0.000000e+00> : vector<2x32xf32>
    %12 = tpu.matmul %11, %10, %cst_10 {dimension_numbers = #tpu.dot_dimension_numbers<[1], [0], [0], [1], [0, 0, 1, 1], [], []>} : vector<2x104xf32>, vector<104x32xf32>, vector<2x32xf32> -> vector<2x32xf32>
    %13 = arith.truncf %12 : vector<2x32xf32> to vector<2x32xbf16>
    %c0_11 = arith.constant 0 : index
    %c0_12 = arith.constant 0 : index
    %14 = vector.load %arg6[%c0_11, %c0_12] : memref<32x128xbf16, #tpu.memory_space<vmem>>, vector<32x128xbf16>
    %cst_13 = arith.constant dense<0.000000e+00> : vector<2x128xf32>
    %15 = tpu.matmul %13, %14, %cst_13 {dimension_numbers = #tpu.dot_dimension_numbers<[1], [0], [0], [1], [0, 0, 1, 1], [], []>} : vector<2x32xbf16>, vector<32x128xbf16>, vector<2x128xf32> -> vector<2x128xf32>
    %c0_14 = arith.constant 0 : index
    %c0_15 = arith.constant 0 : index
    %16 = vector.load %arg7[%c0_14, %c0_15] : memref<1x128xf32, #tpu.memory_space<vmem>>, vector<1x128xf32>
    %17 = vector.broadcast %16 : vector<1x128xf32> to vector<2x128xf32>
    %18 = arith.mulf %15, %17 : vector<2x128xf32>
    %c0_16 = arith.constant 0 : index
    %c0_17 = arith.constant 0 : index
    %19 = vector.load %arg8[%c0_16, %c0_17] : memref<1x128xf32, #tpu.memory_space<vmem>>, vector<1x128xf32>
    %20 = vector.broadcast %19 : vector<1x128xf32> to vector<2x128xf32>
    %21 = arith.addf %18, %20 : vector<2x128xf32>
    %22 = arith.mulf %21, %21 : vector<2x128xf32>
    %cst_18 = arith.constant dense<0.000000e+00> : vector<2xf32>
    %23 = vector.multi_reduction <add>, %22, %cst_18 [1] : vector<2x128xf32> to vector<2xf32>
    %24 = vector.shape_cast %23 : vector<2xf32> to vector<2x1xf32>
    %cst_19 = arith.constant 1.000000e-24 : f32
    %25 = vector.broadcast %cst_19 : f32 to vector<2x1xf32>
    %26 = arith.maximumf %24, %25 : vector<2x1xf32>
    %27 = math.rsqrt %26 : vector<2x1xf32>
    %28 = vector.broadcast %27 : vector<2x1xf32> to vector<2x128xf32>
    %29 = arith.mulf %21, %28 : vector<2x128xf32>
    %c0_20 = arith.constant 0 : index
    %c0_21 = arith.constant 0 : index
    %30 = vector.load %arg9[%c0_20, %c0_21] : memref<2x128xf32, #tpu.memory_space<vmem>>, vector<2x128xf32>
    tpu.vector_store %arg9[%c0_20, %c0_21], %29 {strides = array<i32>} : memref<2x128xf32, #tpu.memory_space<vmem>>, vector<2x128xf32>,
    return
  }
  func.func @transform_0(%arg0: i32) -> (i32, i32) {
    %c0_i32 = arith.constant 0 : i32
    %c0_i32_0 = arith.constant 0 : i32
    %c0_i32_1 = arith.constant 0 : i32
    return %c0_i32, %c0_i32_0 : i32, i32
  }
  func.func @transform_1(%arg0: i32) -> (i32, i32) {
    %c0_i32 = arith.constant 0 : i32
    %c0_i32_0 = arith.constant 0 : i32
    %c0_i32_1 = arith.constant 0 : i32
    return %c0_i32, %c0_i32_0 : i32, i32
  }
  func.func @transform_2(%arg0: i32) -> (i32, i32) {
    %c0_i32 = arith.constant 0 : i32
    %c0_i32_0 = arith.constant 0 : i32
    %c0_i32_1 = arith.constant 0 : i32
    return %c0_i32, %c0_i32_0 : i32, i32
  }
  func.func @transform_3(%arg0: i32) -> (i32, i32) {
    %c0_i32 = arith.constant 0 : i32
    %c0_i32_0 = arith.constant 0 : i32
    %c0_i32_1 = arith.constant 0 : i32
    return %c0_i32, %c0_i32_0 : i32, i32
  }
  func.func @transform_4(%arg0: i32) -> (i32, i32) {
    %c0_i32 = arith.constant 0 : i32
    %c0_i32_0 = arith.constant 0 : i32
    %c0_i32_1 = arith.constant 0 : i32
    return %c0_i32, %c0_i32_0 : i32, i32
  }
  func.func @transform_5(%arg0: i32) -> (i32, i32) {
    %c0_i32 = arith.constant 0 : i32
    %c0_i32_0 = arith.constant 0 : i32
    %c0_i32_1 = arith.constant 0 : i32
    return %c0_i32, %c0_i32_0 : i32, i32
  }
  func.func @transform_6(%arg0: i32) -> (i32, i32) {
    %c0_i32 = arith.constant 0 : i32
    %c0_i32_0 = arith.constant 0 : i32
    %c0_i32_1 = arith.constant 0 : i32
    return %c0_i32, %c0_i32_0 : i32, i32
  }
  func.func @transform_7(%arg0: i32) -> (i32, i32) {
    %c0_i32 = arith.constant 0 : i32
    %c0_i32_0 = arith.constant 0 : i32
    %c0_i32_1 = arith.constant 0 : i32
    return %c0_i32, %c0_i32_0 : i32, i32
  }
  func.func @transform_8(%arg0: i32) -> (i32, i32) {
    %c0_i32 = arith.constant 0 : i32
    %c0_i32_0 = arith.constant 0 : i32
    %c0_i32_1 = arith.constant 0 : i32
    return %c0_i32, %c0_i32_0 : i32, i32
  }
}

</mosaic_0001>

<llo_original>
// kernel: id_encoder_forward.1
$region0: #{id_encoder_forward.1}
  #allocation0 [shape = 'u32[]', space=smem, size = 0x4, offset = 0x4, fixed_abs, tag = 'smem constant byte address 0x4 - core index']
  #allocation1 [shape = 'u32[144,128]{1,0:T(1,128)}', space=vmem, size = 0x12000, scoped, tag = 'internal scratch']
  %s0 = inlined_call_operand.vmem [shape: bf16[104,32], index: 0, kind: input, shape index: {}]
  %s1 = inlined_call_operand.vmem [shape: bf16[32,32], index: 1, kind: input, shape index: {}]
  %s2 = inlined_call_operand.vmem [shape: f32[1,32], index: 2, kind: input, shape index: {}]
  %s3 = inlined_call_operand.vmem [shape: f32[1,32], index: 3, kind: input, shape index: {}]
  %s4 = inlined_call_operand.vmem [shape: f32[2,104], index: 4, kind: input, shape index: {}]
  %s5 = inlined_call_operand.vmem [shape: bf16[32,128], index: 5, kind: input, shape index: {}]
  %s6 = inlined_call_operand.vmem [shape: f32[1,128], index: 6, kind: input, shape index: {}]
  %s7 = inlined_call_operand.vmem [shape: f32[1,128], index: 7, kind: input, shape index: {}]
  %s8 = inlined_call_operand.hbm [shape: f32[2,128], index: 8, kind: output, shape index: {}]
  %s9 = sld [smem:[#allocation0]]
  $region42: #{id_encoder_forward.1} parent=0
    _
  %s11 = ssub.s32 1, %s9
  %s12 = scalar_select 0, %s11, %s9
  $region1: #{id_encoder_forward.1} parent=0
    #allocation2 [shape = 'u8[1024]{0}', space=vmem, size = 0x400, scoped, tag = 'output window, operand 0, single buffered']
    #allocation3 [shape = 's32[1]{0}', space=sflag, size = 0x4, scoped, tag = 'scoped memory for id_encoder_forward.1']
    %13 = vsyncpa [#allocation3], 0
    // Predicated region
    $region2: #{id_encoder_forward.1} parent=1 // pred_check
      _
    $region3: #{id_encoder_forward.1} parent=1 // pred_check_branch
      %15 = sbr.rel (0) target = $region5
    $region4: #{id_encoder_forward.1} parent=1 // pred_region
      _
    $region5: #{id_encoder_forward.1} parent=1 // pred_fallthru
      _
    // Predicated region
    $region6: #{id_encoder_forward.1} parent=1 // pred_check
      _
    $region7: #{id_encoder_forward.1} parent=1 // pred_check_branch
      %17 = sbr.rel (0) target = $region9
    $region8: #{id_encoder_forward.1} parent=1 // pred_region
      _
    $region9: #{id_encoder_forward.1} parent=1 // pred_fallthru
      _
    // Predicated region
    $region10: #{id_encoder_forward.1} parent=1 // pred_check
      _
    $region11: #{id_encoder_forward.1} parent=1 // pred_check_branch
      %19 = sbr.rel (0) target = $region13
    $region12: #{id_encoder_forward.1} parent=1 // pred_region
      _
    $region13: #{id_encoder_forward.1} parent=1 // pred_fallthru
      _
    // Predicated region
    $region14: #{id_encoder_forward.1} parent=1 // pred_check
      _
    $region15: #{id_encoder_forward.1} parent=1 // pred_check_branch
      %21 = sbr.rel (0) target = $region17
    $region16: #{id_encoder_forward.1} parent=1 // pred_region
      _
    $region17: #{id_encoder_forward.1} parent=1 // pred_fallthru
      _
    // Predicated region
    $region18: #{id_encoder_forward.1} parent=1 // pred_check
      _
    $region19: #{id_encoder_forward.1} parent=1 // pred_check_branch
      %23 = sbr.rel (0) target = $region21
    $region20: #{id_encoder_forward.1} parent=1 // pred_region
      _
    $region21: #{id_encoder_forward.1} parent=1 // pred_fallthru
      _
    // Predicated region
    $region22: #{id_encoder_forward.1} parent=1 // pred_check
      _
    $region23: #{id_encoder_forward.1} parent=1 // pred_check_branch
      %25 = sbr.rel (0) target = $region25
    $region24: #{id_encoder_forward.1} parent=1 // pred_region
      _
    $region25: #{id_encoder_forward.1} parent=1 // pred_fallthru
      _
    // Predicated region
    $region26: #{id_encoder_forward.1} parent=1 // pred_check
      _
    $region27: #{id_encoder_forward.1} parent=1 // pred_check_branch
      %27 = sbr.rel (0) target = $region29
    $region28: #{id_encoder_forward.1} parent=1 // pred_region
      _
    $region29: #{id_encoder_forward.1} parent=1 // pred_fallthru
      _
    // Predicated region
    $region30: #{id_encoder_forward.1} parent=1 // pred_check
      _
    $region31: #{id_encoder_forward.1} parent=1 // pred_check_branch
      %29 = sbr.rel (0) target = $region33
    $region32: #{id_encoder_forward.1} parent=1 // pred_region
      _
    $region33: #{id_encoder_forward.1} parent=1 // pred_fallthru
      _
    %v31 = vld [vmem:[%s0] sm:$0xf]
    %v32 = vld [vmem:[%s0 + $0x4] sm:$0xf]
    %v33 = vld [vmem:[%s0 + $0x8] sm:$0xf]
    %v34 = vld [vmem:[%s0 + $0xc] sm:$0xf]
    %v35 = vld [vmem:[%s0 + $0x10] sm:$0xf]
    %v36 = vld [vmem:[%s0 + $0x14] sm:$0xf]
    %v37 = vld [vmem:[%s0 + $0x18] sm:$0xf]
    %v38 = vld [vmem:[%s0 + $0x1c] sm:$0xf]
    %v39 = vld [vmem:[%s0 + $0x20] sm:$0xf]
    %v40 = vld [vmem:[%s0 + $0x24] sm:$0xf]
    %v41 = vld [vmem:[%s0 + $0x28] sm:$0xf]
    %v42 = vld [vmem:[%s0 + $0x2c] sm:$0xf]
    %v43 = vld [vmem:[%s0 + $0x30] sm:$0xf]
    %v44 = vld [vmem:[%s1] sm:$0xf]
    %v45 = vld [vmem:[%s1 + $0x4] sm:$0xf]
    %v46 = vld [vmem:[%s1 + $0x8] sm:$0xf]
    %v47 = vld [vmem:[%s1 + $0xc] sm:$0xf]
    %v61 = vunpack.c.l.b16 %v31
    %v62 = vunpack.c.l.b16 %v32
    %v63 = vunpack.c.l.b16 %v33
    %v64 = vunpack.c.l.b16 %v34
    %v65 = vunpack.c.l.b16 %v35
    %v66 = vunpack.c.l.b16 %v36
    %v67 = vunpack.c.l.b16 %v37
    %v68 = vunpack.c.l.b16 %v38
    %v69 = vunpack.c.l.b16 %v39
    %v70 = vunpack.c.l.b16 %v40
    %v71 = vunpack.c.l.b16 %v41
    %v72 = vunpack.c.l.b16 %v42
    %v73 = vunpack.c.l.b16 %v43
    %v74 = vpack.c.b16 %v62, %v61
    %v75 = vpack.c.b16 %v64, %v63
    %v76 = vpack.c.b16 %v66, %v65
    %v77 = vpack.c.b16 %v68, %v67
    %v78 = vpack.c.b16 %v70, %v69
    %v79 = vpack.c.b16 %v72, %v71
    %v80 = vpack.c.b16 %v73, %v73
    %v85 = vunpack.c.l.b16 %v44
    %v86 = vunpack.c.l.b16 %v45
    %v87 = vunpack.c.l.b16 %v46
    %v88 = vunpack.c.l.b16 %v47
    %v89 = vpack.c.b16 %v86, %v85
    %v90 = vpack.c.b16 %v88, %v87
    %vm93 = vcmask 261120
    %v95 = vsel %vm93, %v74, 0
    %v98 = vsel %vm93, %v75, 0
    %v101 = vsel %vm93, %v76, 0
    %v104 = vsel %vm93, %v77, 0
    %v107 = vsel %vm93, %v78, 0
    %v110 = vsel %vm93, %v79, 0
    %v113 = vsel %vm93, %v80, 0
    %115 = vmatprep.subr.bf16.mxu0 0
    %116 = vmatpush1.bf16.msra.mxu0 0
    %117 = vmatprep.subr.bf16.mxu0 0
    %118 = vmatpush1.bf16.msra.mxu0 0
    %119 = vmatprep.subr.bf16.mxu0 0
    %120 = vmatpush1.bf16.msra.mxu0 0
    %121 = vmatprep.subr.bf16.mxu0 0
    %122 = vmatpush1.bf16.msra.mxu0 0
    %123 = vmatprep.subr.bf16.mxu0 0
    %124 = vmatpush1.bf16.msra.mxu0 0
    %125 = vmatprep.subr.bf16.mxu0 0
    %126 = vmatpush1.bf16.msra.mxu0 0
    %127 = vmatprep.subr.bf16.mxu0 0
    %128 = vmatpush1.bf16.msra.mxu0 %v90
    %129 = vmatprep.subr.bf16.mxu0 0
    %130 = vmatpush1.bf16.msra.mxu0 %v89
    %131 = vmatprep.subr.bf16.mxu0 0
    %132 = vmatpush2.bf16.msra.mxu0 0
    %133 = vmatprep.subr.bf16.mxu0 0
    %134 = vmatpush2.bf16.msra.mxu0 0
    %135 = vmatprep.subr.bf16.mxu0 0
    %136 = vmatpush2.bf16.msra.mxu0 0
    %137 = vmatprep.subr.bf16.mxu0 0
    %138 = vmatpush2.bf16.msra.mxu0 0
    %139 = vmatprep.subr.bf16.mxu0 0
    %140 = vmatpush2.bf16.msra.mxu0 0
    %141 = vmatprep.subr.bf16.mxu0 0
    %142 = vmatpush2.bf16.msra.mxu0 0
    %143 = vmatprep.subr.bf16.mxu0 0
    %144 = vmatpush2.bf16.msra.mxu0 0
    %145 = vmatprep.subr.bf16.mxu0 0
    %146 = vmatpush2.bf16.msra.mxu0 0
    %147 = vmatprep.mubr.bf16.mxu0 0
    %148 = vmatmul.mubr.bf16.gmra.mxu0 %v95
    %v149 = vpop.f32.mrf.mxu0
    %v150 = vadd.f32 0.0, %v149
    %v151 = vpop.f32.mrf.mxu0
    %v152 = vpop.f32.mrf.mxu0
    %v153 = vadd.f32 0.0, %v152
    %v154 = vpop.f32.mrf.mxu0
    %155 = vmatprep.mubr.bf16.mxu0 0
    %156 = vmatmul.mubr.bf16.gmra.mxu0 %v98
    %v157 = vpop.f32.mrf.mxu0
    %v158 = vadd.f32 0.0, %v157
    %v159 = vpop.f32.mrf.mxu0
    %v160 = vpop.f32.mrf.mxu0
    %v161 = vadd.f32 0.0, %v160
    %v162 = vpop.f32.mrf.mxu0
    %163 = vmatprep.mubr.bf16.mxu0 0
    %164 = vmatmul.mubr.bf16.gmra.mxu0 %v101
    %v165 = vpop.f32.mrf.mxu0
    %v166 = vadd.f32 0.0, %v165
    %v167 = vpop.f32.mrf.mxu0
    %v168 = vpop.f32.mrf.mxu0
    %v169 = vadd.f32 0.0, %v168
    %v170 = vpop.f32.mrf.mxu0
    %171 = vmatprep.mubr.bf16.mxu0 0
    %172 = vmatmul.mubr.bf16.gmra.mxu0 %v104
    %v173 = vpop.f32.mrf.mxu0
    %v174 = vadd.f32 0.0, %v173
    %v175 = vpop.f32.mrf.mxu0
    %v176 = vpop.f32.mrf.mxu0
    %v177 = vadd.f32 0.0, %v176
    %v178 = vpop.f32.mrf.mxu0
    %179 = vmatprep.mubr.bf16.mxu0 0
    %180 = vmatmul.mubr.bf16.gmra.mxu0 %v107
    %v181 = vpop.f32.mrf.mxu0
    %v182 = vadd.f32 0.0, %v181
    %v183 = vpop.f32.mrf.mxu0
    %v184 = vpop.f32.mrf.mxu0
    %v185 = vadd.f32 0.0, %v184
    %v186 = vpop.f32.mrf.mxu0
    %187 = vmatprep.mubr.bf16.mxu0 0
    %188 = vmatmul.mubr.bf16.gmra.mxu0 %v110
    %v189 = vpop.f32.mrf.mxu0
    %v190 = vadd.f32 0.0, %v189
    %v191 = vpop.f32.mrf.mxu0
    %v192 = vpop.f32.mrf.mxu0
    %v193 = vadd.f32 0.0, %v192
    %v194 = vpop.f32.mrf.mxu0
    %195 = vmatprep.mubr.bf16.mxu0 0
    %196 = vmatmul.mubr.bf16.gmra.mxu0 %v113
    %v197 = vpop.f32.mrf.mxu0
    %v198 = vadd.f32 0.0, %v197
    %v199 = vpop.f32.mrf.mxu0
    %v200 = vpop.f32.mrf.mxu0
    %v201 = vpop.f32.mrf.mxu0
    %202 = vdwg.mxu0
    %v203 = vld [vmem:[%s2] sm:$0x1]
    %v205 = vlaneseq
    %v206 = vshrl.u32 %v205, 7
    %v207 = vsub.s32 0, %v206
    %v208 = vrot.slane %v203, %v207
    %v210 = vmul.f32 %v150, %v208
    %v211 = vmul.f32 %v153, %v208
    %v212 = vmul.f32 %v158, %v208
    %v213 = vmul.f32 %v161, %v208
    %v214 = vmul.f32 %v166, %v208
    %v215 = vmul.f32 %v169, %v208
    %v216 = vmul.f32 %v174, %v208
    %v217 = vmul.f32 %v177, %v208
    %v218 = vmul.f32 %v182, %v208
    %v219 = vmul.f32 %v185, %v208
    %v220 = vmul.f32 %v190, %v208
    %v221 = vmul.f32 %v193, %v208
    %v222 = vmul.f32 %v198, %v208
    %v223 = vld [vmem:[%s3] sm:$0x1]
    %v225 = vlaneseq
    %v226 = vshrl.u32 %v225, 7
    %v227 = vsub.s32 0, %v226
    %v228 = vrot.slane %v223, %v227
    %v230 = vadd.f32 %v210, %v228
    %v231 = vadd.f32 %v211, %v228
    %v232 = vadd.f32 %v212, %v228
    %v233 = vadd.f32 %v213, %v228
    %v234 = vadd.f32 %v214, %v228
    %v235 = vadd.f32 %v215, %v228
    %v236 = vadd.f32 %v216, %v228
    %v237 = vadd.f32 %v217, %v228
    %v238 = vadd.f32 %v218, %v228
    %v239 = vadd.f32 %v219, %v228
    %v240 = vadd.f32 %v220, %v228
    %v241 = vadd.f32 %v221, %v228
    %v242 = vadd.f32 %v222, %v228
    %v243 = vmax.f32 %v230, 0.0
    %v244 = vmax.f32 %v231, 0.0
    %v245 = vmax.f32 %v232, 0.0
    %v246 = vmax.f32 %v233, 0.0
    %v247 = vmax.f32 %v234, 0.0
    %v248 = vmax.f32 %v235, 0.0
    %v249 = vmax.f32 %v236, 0.0
    %v250 = vmax.f32 %v237, 0.0
    %v251 = vmax.f32 %v238, 0.0
    %v252 = vmax.f32 %v239, 0.0
    %v253 = vmax.f32 %v240, 0.0
    %v254 = vmax.f32 %v241, 0.0
    %v255 = vmax.f32 %v242, 0.0
    %v256 = vld [vmem:[%s4] sm:$0x3]
    %vm257 = vcmask 850944
    %v259 = vsel %vm257, %v256, 0
    %261 = vmatprep.subr.mxu0 0.0
    %262 = vmatpush1.msra.mxu0 0.0
    %263 = vmatprep.subr.mxu0 0.0
    %264 = vmatpush1.msra.mxu0 0.0
    %265 = vmatprep.subr.mxu0 0.0
    %266 = vmatpush1.msra.mxu0 0.0
    %267 = vmatprep.subr.mxu0 0.0
    %268 = vmatpush1.msra.mxu0 %v255
    %269 = vmatprep.subr.mxu0 0.0
    %270 = vmatpush1.msra.mxu0 %v254
    %271 = vmatprep.subr.mxu0 0.0
    %272 = vmatpush1.msra.mxu0 %v253
    %273 = vmatprep.subr.mxu0 0.0
    %274 = vmatpush1.msra.mxu0 %v252
    %275 = vmatprep.subr.mxu0 0.0
    %276 = vmatpush1.msra.mxu0 %v251
    %277 = vmatprep.subr.mxu0 0.0
    %278 = vmatpush1.msra.mxu0 %v250
    %279 = vmatprep.subr.mxu0 0.0
    %280 = vmatpush1.msra.mxu0 %v249
    %281 = vmatprep.subr.mxu0 0.0
    %282 = vmatpush1.msra.mxu0 %v248
    %283 = vmatprep.subr.mxu0 0.0
    %284 = vmatpush1.msra.mxu0 %v247
    %285 = vmatprep.subr.mxu0 0.0
    %286 = vmatpush1.msra.mxu0 %v246
    %287 = vmatprep.subr.mxu0 0.0
    %288 = vmatpush1.msra.mxu0 %v245
    %289 = vmatprep.subr.mxu0 0.0
    %290 = vmatpush1.msra.mxu0 %v244
    %291 = vmatprep.subr.mxu0 0.0
    %292 = vmatpush1.msra.mxu0 %v243
    %293 = vmatprep.subr.mxu0 0.0
    %294 = vmatpush2.msra.mxu0 0.0
    %295 = vmatprep.subr.mxu0 0.0
    %296 = vmatpush2.msra.mxu0 0.0
    %297 = vmatprep.subr.mxu0 0.0
    %298 = vmatpush2.msra.mxu0 0.0
    %299 = vmatprep.subr.mxu0 0.0
    %300 = vmatpush2.msra.mxu0 0.0
    %301 = vmatprep.subr.mxu0 0.0
    %302 = vmatpush2.msra.mxu0 0.0
    %303 = vmatprep.subr.mxu0 0.0
    %304 = vmatpush2.msra.mxu0 0.0
    %305 = vmatprep.subr.mxu0 0.0
    %306 = vmatpush2.msra.mxu0 0.0
    %307 = vmatprep.subr.mxu0 0.0
    %308 = vmatpush2.msra.mxu0 0.0
    %309 = vmatprep.subr.mxu0 0.0
    %310 = vmatpush2.msra.mxu0 0.0
    %311 = vmatprep.subr.mxu0 0.0
    %312 = vmatpush2.msra.mxu0 0.0
    %313 = vmatprep.subr.mxu0 0.0
    %314 = vmatpush2.msra.mxu0 0.0
    %315 = vmatprep.subr.mxu0 0.0
    %316 = vmatpush2.msra.mxu0 0.0
    %317 = vmatprep.subr.mxu0 0.0
    %318 = vmatpush2.msra.mxu0 0.0
    %319 = vmatprep.subr.mxu0 0.0
    %320 = vmatpush2.msra.mxu0 0.0
    %321 = vmatprep.subr.mxu0 0.0
    %322 = vmatpush2.msra.mxu0 0.0
    %323 = vmatprep.subr.mxu0 0.0
    %324 = vmatpush2.msra.mxu0 0.0
    %325 = vmatprep.mubr.f32.mxu0 0.0
    %326 = vmatmul.mubr.f32.gmra.mxu0 %v259
    %v327 = vpop.f32.mrf.mxu0
    %v328 = vadd.f32 0.0, %v327
    %v329 = vpop.f32.mrf.mxu0
    %330 = vdwg.mxu0
    %v331 = vpack.c.bf16 %v328, %v328
    %v332 = vld [vmem:[%s5] sm:$0xf]
    %v333 = vld [vmem:[%s5 + $0x4] sm:$0xf]
    %v334 = vld [vmem:[%s5 + $0x8] sm:$0xf]
    %v335 = vld [vmem:[%s5 + $0xc] sm:$0xf]
    %v340 = vunpack.c.l.b16 %v332
    %v341 = vunpack.c.l.b16 %v333
    %v342 = vunpack.c.l.b16 %v334
    %v343 = vunpack.c.l.b16 %v335
    %v344 = vpack.c.b16 %v341, %v340
    %v345 = vpack.c.b16 %v343, %v342
    %v349 = vsel %vm93, %v331, 0
    %351 = vmatprep.subr.bf16.mxu0 0
    %352 = vmatpush1.bf16.msra.mxu0 0
    %353 = vmatprep.subr.bf16.mxu0 0
    %354 = vmatpush1.bf16.msra.mxu0 0
    %355 = vmatprep.subr.bf16.mxu0 0
    %356 = vmatpush1.bf16.msra.mxu0 0
    %357 = vmatprep.subr.bf16.mxu0 0
    %358 = vmatpush1.bf16.msra.mxu0 0
    %359 = vmatprep.subr.bf16.mxu0 0
    %360 = vmatpush1.bf16.msra.mxu0 0
    %361 = vmatprep.subr.bf16.mxu0 0
    %362 = vmatpush1.bf16.msra.mxu0 0
    %363 = vmatprep.subr.bf16.mxu0 0
    %364 = vmatpush1.bf16.msra.mxu0 %v345
    %365 = vmatprep.subr.bf16.mxu0 0
    %366 = vmatpush1.bf16.msra.mxu0 %v344
    %367 = vmatprep.subr.bf16.mxu0 0
    %368 = vmatpush2.bf16.msra.mxu0 0
    %369 = vmatprep.subr.bf16.mxu0 0
    %370 = vmatpush2.bf16.msra.mxu0 0
    %371 = vmatprep.subr.bf16.mxu0 0
    %372 = vmatpush2.bf16.msra.mxu0 0
    %373 = vmatprep.subr.bf16.mxu0 0
    %374 = vmatpush2.bf16.msra.mxu0 0
    %375 = vmatprep.subr.bf16.mxu0 0
    %376 = vmatpush2.bf16.msra.mxu0 0
    %377 = vmatprep.subr.bf16.mxu0 0
    %378 = vmatpush2.bf16.msra.mxu0 0
    %379 = vmatprep.subr.bf16.mxu0 0
    %380 = vmatpush2.bf16.msra.mxu0 0
    %381 = vmatprep.subr.bf16.mxu0 0
    %382 = vmatpush2.bf16.msra.mxu0 0
    %383 = vmatprep.mubr.bf16.mxu0 0
    %384 = vmatmul.mubr.bf16.gmra.mxu0 %v349
    %v385 = vpop.f32.mrf.mxu0
    %v386 = vadd.f32 0.0, %v385
    %v387 = vpop.f32.mrf.mxu0
    %v388 = vpop.f32.mrf.mxu0
    %v389 = vpop.f32.mrf.mxu0
    %390 = vdwg.mxu0
    %v391 = vld [vmem:[%s6] sm:$0x1]
    %v393 = vlaneseq
    %v394 = vshrl.u32 %v393, 7
    %v395 = vsub.s32 0, %v394
    %v396 = vrot.slane %v391, %v395
    %v398 = vmul.f32 %v386, %v396
    %v399 = vld [vmem:[%s7] sm:$0x1]
    %v401 = vlaneseq
    %v402 = vshrl.u32 %v401, 7
    %v403 = vsub.s32 0, %v402
    %v404 = vrot.slane %v399, %v403
    %v406 = vadd.f32 %v398, %v404
    %v407 = vmul.f32 %v406, %v406
    %vm408 = vcmask 1041408
    %v409 = vsel %vm408, %v407, 0.0
    %410 = vadd.xlane.f32.xlu0 %v409
    %v411 = vpop.xlane.xlu0 %410
    %v412 = vmax.f32 %v411, 1e-24
    %v413 = vrsqrt.pop %v412
    %v414 = vmul.f32 %v406, %v413
    %415 = vst [vmem:[#allocation2] sm:$0x3] %v414
    // Predicated region
    $region34: #{id_encoder_forward.1} parent=1 // pred_check
      _
    $region35: #{id_encoder_forward.1} parent=1 // pred_check_branch
      %417 = sbr.rel (0) target = $region37
    $region36: #{id_encoder_forward.1} parent=1 // pred_region
      %s419 = ssub.s32 32, 32
      %420 = vsyncadd [#allocation3], %s419
      %s422 = sshll.u32 [#allocation2], 4
      %s423 = int_to_ptr.vmem [resolvable:$true] %s422
      %425 = dma.vmem_to_hbm [thread:$0]  %s423, 32, %s8, [#allocation3]
    $region37: #{id_encoder_forward.1} parent=1 // pred_fallthru
      _
    // Predicated region
    $region38: #{id_encoder_forward.1} parent=1 // pred_check
      _
    $region39: #{id_encoder_forward.1} parent=1 // pred_check_branch
      %427 = sbr.rel (0) target = $region41
    $region40: #{id_encoder_forward.1} parent=1 // pred_region
      %428 = dma.done [#allocation3], 32
    $region41: #{id_encoder_forward.1} parent=1 // pred_fallthru
      _
    %429 = vsyncpa [#allocation3], 1

</llo_original>
